<compile_context>
chip_gen: v7x
topology: tpu7x:2x2x1
jax: 0.10.0
libtpu: 0.0.40
codegen_flags: <defaults>
</compile_context>

<pallas_src>
import jax
import jax.numpy as jnp
from jax.experimental import pallas as pl
from jax.experimental.pallas import tpu as pltpu


def _round_up(x, m):
    return (x + m - 1) // m * m


# -----------------------------------------------------------------------------
# Stage 1: per-point MLP (conv1..2 + folded BN + relu, conv3 WITHOUT bias/relu)
# and running max over points.  Grid = (batch_tiles, point_tiles); the output
# block (Bt, 1, 1024) is the resident max accumulator across the point axis.
# -----------------------------------------------------------------------------
def point_mlp_max_kernel(x_ref,
                         w1_ref, b1_ref,
                         w2_ref, b2_ref,
                         w3_ref,
                         g_ref):
    n_idx = pl.program_id(1)

    @pl.when(n_idx == 0)
    def _():
        g_ref[...] = jnp.full(g_ref.shape, -jnp.inf, dtype=g_ref.dtype)

    bt, nt, cp = x_ref.shape
    x = x_ref[...].reshape(bt * nt, cp)                     # bf16, (Bt*Nt, Cp)

    # conv1 + bn1 + relu  -> (Bt*Nt, 64)
    h = jnp.dot(x, w1_ref[...], preferred_element_type=jnp.float32) + b1_ref[...]
    h = jnp.maximum(h, 0.0)
    # conv2 + bn2 + relu  -> (Bt*Nt, 128)
    h = jnp.dot(h.astype(jnp.bfloat16), w2_ref[...],
                preferred_element_type=jnp.float32) + b2_ref[...]
    h = jnp.maximum(h, 0.0)
    # conv3 (bias + relu deferred past the max-pool; per-channel bias and
    # monotonic relu commute with max over points)  -> (Bt*Nt, 1024)
    h = jnp.dot(h.astype(jnp.bfloat16), w3_ref[...],
                preferred_element_type=jnp.float32)

    h = h.reshape(bt, nt, h.shape[-1])                      # (Bt, Nt, 1024)
    tile_max = jnp.max(h, axis=1, keepdims=True)            # (Bt, 1, 1024)
    g_ref[...] = jnp.maximum(g_ref[...], tile_max)


# -----------------------------------------------------------------------------
# Stage 2: deferred conv3 bias+relu on the pooled features, then the FC head
# (fc1/fc2 + folded BN + relu, fc3 + bias + folded identity), lane-padded to
# 128 output columns.  Batch axis is tiled ("parallel").
# -----------------------------------------------------------------------------
def fc_head_kernel(g_ref, b3_ref,
                   w4_ref, b4_ref,
                   w5_ref, b5_ref,
                   w6_ref, b6_ref,
                   o_ref):
    # deferred bn3 bias + relu (commutes with the max pool)
    g = jnp.maximum(g_ref[...] + b3_ref[...], 0.0)          # (Rt, 1024) f32
    f = jnp.dot(g.astype(jnp.bfloat16), w4_ref[...],
                preferred_element_type=jnp.float32) + b4_ref[...]
    f = jnp.maximum(f, 0.0)
    f = jnp.dot(f.astype(jnp.bfloat16), w5_ref[...],
                preferred_element_type=jnp.float32) + b5_ref[...]
    f = jnp.maximum(f, 0.0)
    o_ref[...] = jnp.dot(f.astype(jnp.bfloat16), w6_ref[...],
                         preferred_element_type=jnp.float32) + b6_ref[...]


# -----------------------------------------------------------------------------
# Wrapper: layout / padding / dtype glue + the two pallas_calls.
# -----------------------------------------------------------------------------
def stn3d_forward(x_bcn, params, *, bt=8, nt=256):
    """x_bcn: (B, C, N) float32 (PyTorch layout).  Returns (B, 3, 3)."""
    B, C, N = x_bcn.shape
    w1, b1, w2, b2, w3, b3, w4, b4, w5, b5, w6, b6 = params

    # ---- layout glue: channels-last + bf16 (MXU operand dtype) ----
    x = jnp.transpose(x_bcn, (0, 2, 1)).astype(jnp.bfloat16)        # (B, N, C)

    cp = max(8, _round_up(C, 8))

    # batch tile: keep >= 2 parallel steps whenever B >= 2 (feeds v7x's 2 TCs)
    bt_eff = min(bt, B)
    if B >= 2:
        bt_eff = min(bt_eff, max(1, B // 2))
    bpad = _round_up(B, bt_eff)

    # point tile: multiple of 8, capped so bt*nt <= 2048 rows (the f32 conv3
    # intermediate stays ~8 MiB -> comfortably within v7x's 64 MiB VMEM).
    nt_eff = min(_round_up(nt, 8), _round_up(N, 8))
    nt_cap = max(8, (2048 // bt_eff) // 8 * 8)
    nt_eff = min(nt_eff, nt_cap)
    npad = _round_up(N, nt_eff)

    # Edge-pad the point axis (duplicated points cannot change the max), so no
    # masking is needed in-kernel.  Zero-pad only the batch / channel axes.
    if npad > N:
        x = jnp.pad(x, ((0, 0), (0, npad - N), (0, 0)), mode="edge")
    x = jnp.pad(x, ((0, bpad - B), (0, 0), (0, cp - C)))

    w1p = jnp.pad(w1, ((0, cp - C), (0, 0)))                         # zero rows
    w1b, w2b, w3b = (w.astype(jnp.bfloat16) for w in (w1p, w2, w3))
    w4b, w5b = (w.astype(jnp.bfloat16) for w in (w4, w5))
    # fc3: pad the 9-wide output to 128 lanes (lane-dense MXU push + stores).
    w6b = jnp.pad(w6, ((0, 0), (0, 128 - w6.shape[1]))).astype(jnp.bfloat16)
    b6p = jnp.pad(b6, ((0, 0), (0, 128 - b6.shape[1])))

    # ---- stage 1: per-point MLP + running max -> pooled (Bp, 1, 1024) ----
    grid = (bpad // bt_eff, npad // nt_eff)
    pooled = pl.pallas_call(
        point_mlp_max_kernel,
        out_shape=jax.ShapeDtypeStruct((bpad, 1, 1024), jnp.float32),
        grid_spec=pltpu.PrefetchScalarGridSpec(
            num_scalar_prefetch=0,
            grid=grid,
            in_specs=[
                pl.BlockSpec((bt_eff, nt_eff, cp), lambda b, n: (b, n, 0)),
                pl.BlockSpec((cp, 64),    lambda b, n: (0, 0)),
                pl.BlockSpec((1, 64),     lambda b, n: (0, 0)),
                pl.BlockSpec((64, 128),   lambda b, n: (0, 0)),
                pl.BlockSpec((1, 128),    lambda b, n: (0, 0)),
                pl.BlockSpec((128, 1024), lambda b, n: (0, 0)),
            ],
            out_specs=pl.BlockSpec((bt_eff, 1, 1024), lambda b, n: (b, 0, 0)),
        ),
        compiler_params=pltpu.CompilerParams(
            dimension_semantics=("parallel", "arbitrary"),
            vmem_limit_bytes=48 * 1024 * 1024,
        ),
    )(x, w1b, b1, w2b, b2, w3b)

    # ---- stage 2: FC head over batch-row tiles (M = rows per step) ----
    g = pooled.reshape(bpad, 1024)
    rt = min(256, _round_up(bpad, 8))
    bpad2 = _round_up(bpad, rt)
    if bpad2 > bpad:
        g = jnp.pad(g, ((0, bpad2 - bpad), (0, 0)))

    out_p = pl.pallas_call(
        fc_head_kernel,
        out_shape=jax.ShapeDtypeStruct((bpad2, 128), jnp.float32),
        grid_spec=pltpu.PrefetchScalarGridSpec(
            num_scalar_prefetch=0,
            grid=(bpad2 // rt,),
            in_specs=[
                pl.BlockSpec((rt, 1024),  lambda i: (i, 0)),
                pl.BlockSpec((1, 1024),   lambda i: (0, 0)),
                pl.BlockSpec((1024, 512), lambda i: (0, 0)),
                pl.BlockSpec((1, 512),    lambda i: (0, 0)),
                pl.BlockSpec((512, 256),  lambda i: (0, 0)),
                pl.BlockSpec((1, 256),    lambda i: (0, 0)),
                pl.BlockSpec((256, 128),  lambda i: (0, 0)),
                pl.BlockSpec((1, 128),    lambda i: (0, 0)),
            ],
            out_specs=pl.BlockSpec((rt, 128), lambda i: (i, 0)),
        ),
        compiler_params=pltpu.CompilerParams(
            dimension_semantics=("parallel",),
            vmem_limit_bytes=48 * 1024 * 1024,
        ),
    )(g, b3, w4b, b4, w5b, b5, w6b, b6p)

    return out_p[:B, :9].reshape(B, 3, 3)


# -----------------------------------------------------------------------------
# Deterministic parameter construction + eval-mode BatchNorm folding (glue).
# -----------------------------------------------------------------------------
def make_params(key, channel):
    dims = [(channel, 64), (64, 128), (128, 1024), (1024, 512), (512, 256), (256, 9)]
    bn_dims = [64, 128, 1024, 512, 256]              # bn1..bn5 (fc3 has no BN)
    eps = 1e-5

    keys = jax.random.split(key, 4 * 6)
    params = []
    for i, (din, dout) in enumerate(dims):
        w = jax.random.normal(keys[4 * i + 0], (din, dout), jnp.float32) * 0.05
        b = jax.random.normal(keys[4 * i + 1], (dout,), jnp.float32) * 0.05
        if i < len(bn_dims):
            d = bn_dims[i]
            kg, kb2, km, kv = jax.random.split(keys[4 * i + 2], 4)
            gamma = 1.0 + 0.1 * jax.random.normal(kg, (d,), jnp.float32)
            beta = 0.1 * jax.random.normal(kb2, (d,), jnp.float32)
            rmean = 0.1 * jax.random.normal(km, (d,), jnp.float32)
            rvar = jnp.abs(1.0 + 0.1 * jax.random.normal(kv, (d,), jnp.float32))
            s = gamma / jnp.sqrt(rvar + eps)
            w_f = w * s[None, :]
            b_f = s * (b - rmean) + beta
        else:
            # fc3: no BN; fold the flattened 3x3 identity into the bias
            # (x = fc3(...) + iden in the reference forward).
            iden = jnp.array([1, 0, 0, 0, 1, 0, 0, 0, 1], jnp.float32)
            w_f = w
            b_f = b + iden
        params.append(w_f)
        params.append(b_f.reshape(1, -1))
    return tuple(params)


def reference_forward(x_bcn, params):
    """Pure-JAX reference using the same bf16 matmul operands / f32 accumulate."""
    w1, b1, w2, b2, w3, b3, w4, b4, w5, b5, w6, b6 = params
    bf, f32 = jnp.bfloat16, jnp.float32

    def mm(a, w):
        return jnp.dot(a.astype(bf), w.astype(bf), preferred_element_type=f32)

    x = jnp.transpose(x_bcn, (0, 2, 1)).astype(f32)          # (B, N, C)
    h = jax.nn.relu(mm(x, w1) + b1)
    h = jax.nn.relu(mm(h, w2) + b2)
    h = jax.nn.relu(mm(h, w3) + b3)
    g = jnp.max(h, axis=1)                                   # (B, 1024)
    f = jax.nn.relu(mm(g, w4) + b4)
    f = jax.nn.relu(mm(f, w5) + b5)
    out = mm(f, w6) + b6
    return out.reshape(-1, 3, 3)


if __name__ == "__main__":
    B, C, N = 4, 3, 24                                       # small shapes
    key = jax.random.PRNGKey(0)
    kx, kp = jax.random.split(key)
    x = jax.random.normal(kx, (B, C, N), jnp.float32)        # PyTorch NCW layout
    params = make_params(kp, C)

    # bt=2 -> 2 parallel batch-tile steps; nt=16 with N=24 -> 2 point-tile steps
    # including an edge-padded tile, exercising the running-max path; stage 2
    # pads the 4 batch rows to an 8-row tile and the 9-wide output to 128 lanes.
    out = stn3d_forward(x, params, bt=2, nt=16)
    out = jax.block_until_ready(out)

    ref = reference_forward(x, params)
    assert out.shape == (B, 3, 3)
    assert jnp.allclose(out, ref, atol=1e-2, rtol=1e-2), float(
        jnp.max(jnp.abs(out - ref)))

    print("KERNEL_OK")
</pallas_src>

<mosaic_0001>
module attributes {stable_mosaic.version = 11 : i64} {
  func.func @point_mlp_max_kernel(%arg0: i32, %arg1: i32, %arg2: memref<2x16x8xbf16, #tpu.memory_space<vmem>>, %arg3: memref<8x64xbf16, #tpu.memory_space<vmem>>, %arg4: memref<1x64xf32, #tpu.memory_space<vmem>>, %arg5: memref<64x128xbf16, #tpu.memory_space<vmem>>, %arg6: memref<1x128xf32, #tpu.memory_space<vmem>>, %arg7: memref<128x1024xbf16, #tpu.memory_space<vmem>>, %arg8: memref<2x1x1024xf32, #tpu.memory_space<vmem>>) attributes {dimension_semantics = [#tpu.dimension_semantics<parallel>, #tpu.dimension_semantics<arbitrary>], iteration_bounds = array<i64: 2, 2>, scalar_prefetch = 0 : i64, scratch_operands = 0 : i64, tpu.core_type = #tpu.core_type<tc>, window_params = [{transform_indices = @transform_0, window_bounds = array<i64: 2, 16, 8>}, {pipeline_mode = #tpu.pipeline_mode<synchronous>, transform_indices = @transform_1, window_bounds = array<i64: 8, 64>}, {pipeline_mode = #tpu.pipeline_mode<synchronous>, transform_indices = @transform_2, window_bounds = array<i64: 1, 64>}, {pipeline_mode = #tpu.pipeline_mode<synchronous>, transform_indices = @transform_3, window_bounds = array<i64: 64, 128>}, {pipeline_mode = #tpu.pipeline_mode<synchronous>, transform_indices = @transform_4, window_bounds = array<i64: 1, 128>}, {pipeline_mode = #tpu.pipeline_mode<synchronous>, transform_indices = @transform_5, window_bounds = array<i64: 128, 1024>}, {transform_indices = @transform_6, window_bounds = array<i64: 2, 1, 1024>}]} {
    %c0_i32 = arith.constant 0 : i32
    %0 = arith.cmpi eq, %arg1, %c0_i32 : i32
    %1 = arith.extui %0 : i1 to i32
    %c0_i32_0 = arith.constant 0 : i32
    %2 = arith.cmpi ne, %1, %c0_i32_0 : i32
    scf.if %2 {
      %cst_24 = arith.constant 0xFF800000 : f32
      %29 = vector.broadcast %cst_24 : f32 to vector<2x1x1024xf32>
      %c0_25 = arith.constant 0 : index
      %c0_26 = arith.constant 0 : index
      %c0_27 = arith.constant 0 : index
      %30 = vector.load %arg8[%c0_25, %c0_26, %c0_27] : memref<2x1x1024xf32, #tpu.memory_space<vmem>>, vector<2x1x1024xf32>
      tpu.vector_store %arg8[%c0_25, %c0_26, %c0_27], %29 {strides = array<i32>} : memref<2x1x1024xf32, #tpu.memory_space<vmem>>, vector<2x1x1024xf32>,
    } else {
    }
    %c0 = arith.constant 0 : index
    %c0_1 = arith.constant 0 : index
    %c0_2 = arith.constant 0 : index
    %3 = vector.load %arg2[%c0, %c0_1, %c0_2] : memref<2x16x8xbf16, #tpu.memory_space<vmem>>, vector<2x16x8xbf16>
    %4 = vector.shape_cast %3 : vector<2x16x8xbf16> to vector<32x8xbf16>
    %c0_3 = arith.constant 0 : index
    %c0_4 = arith.constant 0 : index
    %5 = vector.load %arg3[%c0_3, %c0_4] : memref<8x64xbf16, #tpu.memory_space<vmem>>, vector<8x64xbf16>
    %cst = arith.constant dense<0.000000e+00> : vector<32x64xf32>
    %6 = tpu.matmul %4, %5, %cst {dimension_numbers = #tpu.dot_dimension_numbers<[1], [0], [0], [1], [0, 0, 1, 1], [], []>} : vector<32x8xbf16>, vector<8x64xbf16>, vector<32x64xf32> -> vector<32x64xf32>
    %c0_5 = arith.constant 0 : index
    %c0_6 = arith.constant 0 : index
    %7 = vector.load %arg4[%c0_5, %c0_6] : memref<1x64xf32, #tpu.memory_space<vmem>>, vector<1x64xf32>
    %8 = vector.broadcast %7 : vector<1x64xf32> to vector<32x64xf32>
    %9 = arith.addf %6, %8 : vector<32x64xf32>
    %cst_7 = arith.constant 0.000000e+00 : f32
    %10 = vector.broadcast %cst_7 : f32 to vector<32x64xf32>
    %11 = arith.maximumf %9, %10 : vector<32x64xf32>
    %12 = arith.truncf %11 : vector<32x64xf32> to vector<32x64xbf16>
    %c0_8 = arith.constant 0 : index
    %c0_9 = arith.constant 0 : index
    %13 = vector.load %arg5[%c0_8, %c0_9] : memref<64x128xbf16, #tpu.memory_space<vmem>>, vector<64x128xbf16>
    %cst_10 = arith.constant dense<0.000000e+00> : vector<32x128xf32>
    %14 = tpu.matmul %12, %13, %cst_10 {dimension_numbers = #tpu.dot_dimension_numbers<[1], [0], [0], [1], [0, 0, 1, 1], [], []>} : vector<32x64xbf16>, vector<64x128xbf16>, vector<32x128xf32> -> vector<32x128xf32>
    %c0_11 = arith.constant 0 : index
    %c0_12 = arith.constant 0 : index
    %15 = vector.load %arg6[%c0_11, %c0_12] : memref<1x128xf32, #tpu.memory_space<vmem>>, vector<1x128xf32>
    %16 = vector.broadcast %15 : vector<1x128xf32> to vector<32x128xf32>
    %17 = arith.addf %14, %16 : vector<32x128xf32>
    %cst_13 = arith.constant 0.000000e+00 : f32
    %18 = vector.broadcast %cst_13 : f32 to vector<32x128xf32>
    %19 = arith.maximumf %17, %18 : vector<32x128xf32>
    %20 = arith.truncf %19 : vector<32x128xf32> to vector<32x128xbf16>
    %c0_14 = arith.constant 0 : index
    %c0_15 = arith.constant 0 : index
    %21 = vector.load %arg7[%c0_14, %c0_15] : memref<128x1024xbf16, #tpu.memory_space<vmem>>, vector<128x1024xbf16>
    %cst_16 = arith.constant dense<0.000000e+00> : vector<32x1024xf32>
    %22 = tpu.matmul %20, %21, %cst_16 {dimension_numbers = #tpu.dot_dimension_numbers<[1], [0], [0], [1], [0, 0, 1, 1], [], []>} : vector<32x128xbf16>, vector<128x1024xbf16>, vector<32x1024xf32> -> vector<32x1024xf32>
    %23 = vector.shape_cast %22 : vector<32x1024xf32> to vector<2x16x1024xf32>
    %cst_17 = arith.constant dense<0xFF800000> : vector<2x1024xf32>
    %24 = vector.multi_reduction <maximumf>, %23, %cst_17 [1] : vector<2x16x1024xf32> to vector<2x1024xf32>
    %25 = vector.shape_cast %24 : vector<2x1024xf32> to vector<2x1x1024xf32>
    %c0_18 = arith.constant 0 : index
    %c0_19 = arith.constant 0 : index
    %c0_20 = arith.constant 0 : index
    %26 = vector.load %arg8[%c0_18, %c0_19, %c0_20] : memref<2x1x1024xf32, #tpu.memory_space<vmem>>, vector<2x1x1024xf32>
    %27 = arith.maximumf %26, %25 : vector<2x1x1024xf32>
    %c0_21 = arith.constant 0 : index
    %c0_22 = arith.constant 0 : index
    %c0_23 = arith.constant 0 : index
    %28 = vector.load %arg8[%c0_21, %c0_22, %c0_23] : memref<2x1x1024xf32, #tpu.memory_space<vmem>>, vector<2x1x1024xf32>
    tpu.vector_store %arg8[%c0_21, %c0_22, %c0_23], %27 {strides = array<i32>} : memref<2x1x1024xf32, #tpu.memory_space<vmem>>, vector<2x1x1024xf32>,
    return
  }
  func.func @transform_0(%arg0: i32, %arg1: i32) -> (i32, i32, i32) {
    %c0_i32 = arith.constant 0 : i32
    %c0_i32_0 = arith.constant 0 : i32
    return %arg0, %arg1, %c0_i32 : i32, i32, i32
  }
  func.func @transform_1(%arg0: i32, %arg1: i32) -> (i32, i32) {
    %c0_i32 = arith.constant 0 : i32
    %c0_i32_0 = arith.constant 0 : i32
    %c0_i32_1 = arith.constant 0 : i32
    return %c0_i32, %c0_i32_0 : i32, i32
  }
  func.func @transform_2(%arg0: i32, %arg1: i32) -> (i32, i32) {
    %c0_i32 = arith.constant 0 : i32
    %c0_i32_0 = arith.constant 0 : i32
    %c0_i32_1 = arith.constant 0 : i32
    return %c0_i32, %c0_i32_0 : i32, i32
  }
  func.func @transform_3(%arg0: i32, %arg1: i32) -> (i32, i32) {
    %c0_i32 = arith.constant 0 : i32
    %c0_i32_0 = arith.constant 0 : i32
    %c0_i32_1 = arith.constant 0 : i32
    return %c0_i32, %c0_i32_0 : i32, i32
  }
  func.func @transform_4(%arg0: i32, %arg1: i32) -> (i32, i32) {
    %c0_i32 = arith.constant 0 : i32
    %c0_i32_0 = arith.constant 0 : i32
    %c0_i32_1 = arith.constant 0 : i32
    return %c0_i32, %c0_i32_0 : i32, i32
  }
  func.func @transform_5(%arg0: i32, %arg1: i32) -> (i32, i32) {
    %c0_i32 = arith.constant 0 : i32
    %c0_i32_0 = arith.constant 0 : i32
    %c0_i32_1 = arith.constant 0 : i32
    return %c0_i32, %c0_i32_0 : i32, i32
  }
  func.func @transform_6(%arg0: i32, %arg1: i32) -> (i32, i32, i32) {
    %c0_i32 = arith.constant 0 : i32
    %c0_i32_0 = arith.constant 0 : i32
    %c0_i32_1 = arith.constant 0 : i32
    return %arg0, %c0_i32, %c0_i32_0 : i32, i32, i32
  }
}

</mosaic_0001>

<llo_original>
// kernel: tpu_custom_call.1
$region0: #{tpu_custom_call.1}
  #allocation0 [shape = 'u32[]', space=smem, size = 0x4, offset = 0x4, fixed_abs, tag = 'smem constant byte address 0x4 - core index']
  #allocation1 [shape = 'u32[144,128]{1,0:T(1,128)}', space=vmem, size = 0x12000, scoped, tag = 'internal scratch']
  %s0 = inlined_call_operand.vmem [shape: bf16[4,32,8], index: 0, kind: input, shape index: {}]
  %s1 = inlined_call_operand.vmem [shape: bf16[8,64], index: 1, kind: input, shape index: {}]
  %s2 = inlined_call_operand.vmem [shape: f32[1,64], index: 2, kind: input, shape index: {}]
  %s3 = inlined_call_operand.vmem [shape: bf16[64,128], index: 3, kind: input, shape index: {}]
  %s4 = inlined_call_operand.vmem [shape: f32[1,128], index: 4, kind: input, shape index: {}]
  %s5 = inlined_call_operand.hbm [shape: bf16[128,1024], index: 5, kind: input, shape index: {}]
  %s6 = inlined_call_operand.hbm [shape: f32[4,1,1024], index: 6, kind: output, shape index: {}]
  %s7 = sld [smem:[#allocation0]]
  $region106: #{tpu_custom_call.1} parent=0
    _
  %s9 = ssub.s32 1, %s7
  %s10 = scalar_select 0, %s9, %s7
  $region1: #{tpu_custom_call.1} parent=0
    #allocation2 [shape = 'u8[16384]{0}', space=vmem, size = 0x4000, scoped, tag = 'input window, operand 0']
    #allocation3 [shape = 'u8[262144]{0}', space=vmem, size = 0x40000, scoped, tag = 'input window, operand 5, single buffered']
    #allocation4 [shape = 's32[2]{0}', space=sflag, size = 0x8, scoped, tag = 'scoped memory for tpu_custom_call.1']
    #allocation5 [shape = 's32[2]{0}', space=sflag, size = 0x8, scoped, tag = 'scoped memory for tpu_custom_call.1']
    #allocation6 [shape = 'u8[16384]{0}', space=vmem, size = 0x4000, scoped, tag = 'output window, operand 0']
    %11 = vsyncpa [#allocation4], 0
    %12 = vsyncpa [#allocation5], 0
    %s13 = scalar_lea.sflag [#allocation5], 1
    %14 = vsyncpa %s13, 0
    loop: start=0, step=1, limit=6
    $region2: #{tpu_custom_call.1} parent=1 // loop_pre_header
      _
    $region3: #{tpu_custom_call.1} parent=1 // loop_header
      %s16 = sphi 0, %s20
      %p17 = scmp.ge.s32.totalorder %s16, 6
      %s23 = sphi 0, %s35
      %s24 = sphi 0, %s31
      %s25 = sphi 0, %s23
      %s26 = sphi 0, %s24
      %s27 = sphi 0, %s25
      %s28 = sphi 0, %s26
      %s40 = sphi 0, %s42
      %s43 = sphi 0, %s40
      %s44 = sphi 0, %s43
      %s60 = sphi 0, %s44
      %s64 = sphi 0, %s64
      %s66 = sphi 0, %s64
      %s67 = sphi 0, %s66
      %s81 = sphi 0, %s67
      %s85 = sphi 0, %s85
      %s87 = sphi 0, %s85
      %s88 = sphi 0, %s87
      %s102 = sphi 0, %s88
      %s106 = sphi 0, %s106
      %s108 = sphi 0, %s106
      %s109 = sphi 0, %s108
      %s123 = sphi 0, %s109
      %s127 = sphi 0, %s127
      %s129 = sphi 0, %s127
      %s130 = sphi 0, %s129
      %s144 = sphi 0, %s130
      %s148 = sphi 0, %s148
      %s150 = sphi 0, %s148
      %s151 = sphi 0, %s150
      %s165 = sphi 0, %s151
      %s171 = sphi 0, %s173
      %s174 = sphi 0, %s171
      %s175 = sphi 0, %s174
      %s191 = sphi 0, %s175
    $region4: #{tpu_custom_call.1} parent=1 // loop_header_branch
      %19 = sbr.rel (%p17) target = $region8
    $region5: #{tpu_custom_call.1} parent=1 // loop_body
      %s21 = ssub.s32 %s16, 1
      %s22 = ssub.s32 %s16, 2
      %s29 = sadd.s32 1, %s24
      %p30 = scmp.ge.s32.totalorder %s29, 2
      %s31 = scalar_select %p30, 0, %s29
      %s32 = sadd.s32 1, %s23
      %s33 = scalar_select %p30, %s32, %s23
      %p34 = scmp.ge.s32.totalorder %s33, 2
      %s35 = scalar_select %p34, 0, %s33
      %s36 = ssub.s32 %s23, %s35
      %s37 = ssub.s32 %s24, %s31
      %s38 = sor.u32 %s36, %s37
      %p39 = scmp.eq.s32.totalorder %s38, 0
      %s41 = sadd.s32 %s40, 1
      %s42 = scalar_select %p39, %s40, %s41
      %p45 = pneg %p39
      %p46 = scmp.eq.s32.totalorder %s16, 3
      %p47 = por %p45, %p46
      %p48 = scmp.ne.s32.totalorder %s40, %s43
      %p49 = scmp.eq.s32.totalorder %s16, 0
      %p50 = por %p48, %p49
      %p51 = scmp.ne.s32.totalorder %s40, %s43
      %p52 = scmp.eq.s32.totalorder %s21, 3
      %p53 = por %p51, %p52
      %p54 = scmp.ne.s32.totalorder %s43, %s44
      %p55 = scmp.eq.s32.totalorder %s21, 0
      %p56 = por %p54, %p55
      %p57 = scmp.ne.s32.totalorder %s43, %s44
      %p58 = scmp.eq.s32.totalorder %s22, 3
      %p59 = por %p57, %p58
      %p61 = scmp.ne.s32.totalorder %s44, %s60
      %p62 = scmp.eq.s32.totalorder %s22, 0
      %p63 = por %p61, %p62
      %s65 = sadd.s32 %s64, 1
      %p68 = scmp.eq.s32.totalorder %s16, 3
      %p69 = scmp.ne.s32.totalorder %s64, %s66
      %p70 = scmp.eq.s32.totalorder %s16, 0
      %p71 = por %p69, %p70
      %p72 = scmp.ne.s32.totalorder %s64, %s66
      %p73 = scmp.eq.s32.totalorder %s21, 3
      %p74 = por %p72, %p73
      %p75 = scmp.ne.s32.totalorder %s66, %s67
      %p76 = scmp.eq.s32.totalorder %s21, 0
      %p77 = por %p75, %p76
      %p78 = scmp.ne.s32.totalorder %s66, %s67
      %p79 = scmp.eq.s32.totalorder %s22, 3
      %p80 = por %p78, %p79
      %p82 = scmp.ne.s32.totalorder %s67, %s81
      %p83 = scmp.eq.s32.totalorder %s22, 0
      %p84 = por %p82, %p83
      %s86 = sadd.s32 %s85, 1
      %p89 = scmp.eq.s32.totalorder %s16, 3
      %p90 = scmp.ne.s32.totalorder %s85, %s87
      %p91 = scmp.eq.s32.totalorder %s16, 0
      %p92 = por %p90, %p91
      %p93 = scmp.ne.s32.totalorder %s85, %s87
      %p94 = scmp.eq.s32.totalorder %s21, 3
      %p95 = por %p93, %p94
      %p96 = scmp.ne.s32.totalorder %s87, %s88
      %p97 = scmp.eq.s32.totalorder %s21, 0
      %p98 = por %p96, %p97
      %p99 = scmp.ne.s32.totalorder %s87, %s88
      %p100 = scmp.eq.s32.totalorder %s22, 3
      %p101 = por %p99, %p100
      %p103 = scmp.ne.s32.totalorder %s88, %s102
      %p104 = scmp.eq.s32.totalorder %s22, 0
      %p105 = por %p103, %p104
      %s107 = sadd.s32 %s106, 1
      %p110 = scmp.eq.s32.totalorder %s16, 3
      %p111 = scmp.ne.s32.totalorder %s106, %s108
      %p112 = scmp.eq.s32.totalorder %s16, 0
      %p113 = por %p111, %p112
      %p114 = scmp.ne.s32.totalorder %s106, %s108
      %p115 = scmp.eq.s32.totalorder %s21, 3
      %p116 = por %p114, %p115
      %p117 = scmp.ne.s32.totalorder %s108, %s109
      %p118 = scmp.eq.s32.totalorder %s21, 0
      %p119 = por %p117, %p118
      %p120 = scmp.ne.s32.totalorder %s108, %s109
      %p121 = scmp.eq.s32.totalorder %s22, 3
      %p122 = por %p120, %p121
      %p124 = scmp.ne.s32.totalorder %s109, %s123
      %p125 = scmp.eq.s32.totalorder %s22, 0
      %p126 = por %p124, %p125
      %s128 = sadd.s32 %s127, 1
      %p131 = scmp.eq.s32.totalorder %s16, 3
      %p132 = scmp.ne.s32.totalorder %s127, %s129
      %p133 = scmp.eq.s32.totalorder %s16, 0
      %p134 = por %p132, %p133
      %p135 = scmp.ne.s32.totalorder %s127, %s129
      %p136 = scmp.eq.s32.totalorder %s21, 3
      %p137 = por %p135, %p136
      %p138 = scmp.ne.s32.totalorder %s129, %s130
      %p139 = scmp.eq.s32.totalorder %s21, 0
      %p140 = por %p138, %p139
      %p141 = scmp.ne.s32.totalorder %s129, %s130
      %p142 = scmp.eq.s32.totalorder %s22, 3
      %p143 = por %p141, %p142
      %p145 = scmp.ne.s32.totalorder %s130, %s144
      %p146 = scmp.eq.s32.totalorder %s22, 0
      %p147 = por %p145, %p146
      %s149 = sadd.s32 %s148, 1
      %p152 = scmp.eq.s32.totalorder %s16, 3
      %p153 = scmp.ne.s32.totalorder %s148, %s150
      %p154 = scmp.eq.s32.totalorder %s16, 0
      %p155 = por %p153, %p154
      %p156 = scmp.ne.s32.totalorder %s148, %s150
      %p157 = scmp.eq.s32.totalorder %s21, 3
      %p158 = por %p156, %p157
      %p159 = scmp.ne.s32.totalorder %s150, %s151
      %p160 = scmp.eq.s32.totalorder %s21, 0
      %p161 = por %p159, %p160
      %p162 = scmp.ne.s32.totalorder %s150, %s151
      %p163 = scmp.eq.s32.totalorder %s22, 3
      %p164 = por %p162, %p163
      %p166 = scmp.ne.s32.totalorder %s151, %s165
      %p167 = scmp.eq.s32.totalorder %s22, 0
      %p168 = por %p166, %p167
      %s169 = ssub.s32 %s23, %s35
      %p170 = scmp.eq.s32.totalorder %s169, 0
      %s172 = sadd.s32 %s171, 1
      %s173 = scalar_select %p170, %s171, %s172
      %p176 = pneg %p170
      %p177 = scmp.eq.s32.totalorder %s16, 3
      %p178 = por %p176, %p177
      %p179 = scmp.ne.s32.totalorder %s171, %s174
      %p180 = scmp.eq.s32.totalorder %s16, 0
      %p181 = por %p179, %p180
      %p182 = scmp.ne.s32.totalorder %s171, %s174
      %p183 = scmp.eq.s32.totalorder %s21, 3
      %p184 = por %p182, %p183
      %p185 = scmp.ne.s32.totalorder %s174, %s175
      %p186 = scmp.eq.s32.totalorder %s21, 0
      %p187 = por %p185, %p186
      %p188 = scmp.ne.s32.totalorder %s174, %s175
      %p189 = scmp.eq.s32.totalorder %s22, 3
      %p190 = por %p188, %p189
      %p192 = scmp.ne.s32.totalorder %s175, %s191
      %p193 = scmp.eq.s32.totalorder %s22, 0
      %p194 = por %p192, %p193
      %p195 = scmp.le.s32.totalorder 1, %s16
      %p196 = scmp.lt.s32.totalorder %s16, 5
      %p197 = pnand %p195, %p196
      %p198 = pneg %p197
      // Predicated region
      $region9: #{tpu_custom_call.1} parent=5 // pred_check
        _
      $region10: #{tpu_custom_call.1} parent=5 // pred_check_branch
        %200 = sbr.rel (%p197) target = $region12
      $region11: #{tpu_custom_call.1} parent=5 // pred_region
        %s201 = ssub.s32 %s16, 1
        // Predicated region
        $region13: #{tpu_custom_call.1} parent=11 // pred_check
          %p202 = pneg %p77
        $region14: #{tpu_custom_call.1} parent=11 // pred_check_branch
          %204 = sbr.rel (%p202) target = $region16
        $region15: #{tpu_custom_call.1} parent=11 // pred_region
          _
        $region16: #{tpu_custom_call.1} parent=11 // pred_fallthru
          _
        // Predicated region
        $region17: #{tpu_custom_call.1} parent=11 // pred_check
          %p205 = pneg %p98
        $region18: #{tpu_custom_call.1} parent=11 // pred_check_branch
          %207 = sbr.rel (%p205) target = $region20
        $region19: #{tpu_custom_call.1} parent=11 // pred_region
          _
        $region20: #{tpu_custom_call.1} parent=11 // pred_fallthru
          _
        // Predicated region
        $region21: #{tpu_custom_call.1} parent=11 // pred_check
          %p208 = pneg %p119
        $region22: #{tpu_custom_call.1} parent=11 // pred_check_branch
          %210 = sbr.rel (%p208) target = $region24
        $region23: #{tpu_custom_call.1} parent=11 // pred_region
          _
        $region24: #{tpu_custom_call.1} parent=11 // pred_fallthru
          _
        // Predicated region
        $region25: #{tpu_custom_call.1} parent=11 // pred_check
          %p211 = pneg %p140
        $region26: #{tpu_custom_call.1} parent=11 // pred_check_branch
          %213 = sbr.rel (%p211) target = $region28
        $region27: #{tpu_custom_call.1} parent=11 // pred_region
          _
        $region28: #{tpu_custom_call.1} parent=11 // pred_fallthru
          _
        // Predicated region
        $region29: #{tpu_custom_call.1} parent=11 // pred_check
          %p214 = pneg %p161
        $region30: #{tpu_custom_call.1} parent=11 // pred_check_branch
          %216 = sbr.rel (%p214) target = $region32
        $region31: #{tpu_custom_call.1} parent=11 // pred_region
          %s218 = ssub.s32 8192, 8192
          %219 = vsyncadd [#allocation4], %s218
          %s220 = sshll.u32 [#allocation3], 4
          %s221 = int_to_ptr.vmem [resolvable:$true] %s220
          %226 = dma.hbm_to_vmem [thread:$0]  %s5, 8192, %s221, [#allocation4], 512, 512, 32
        $region32: #{tpu_custom_call.1} parent=11 // pred_fallthru
          _
      $region12: #{tpu_custom_call.1} parent=5 // pred_fallthru
        _
      %p227 = scmp.lt.s32.totalorder %s16, 4
      // Predicated region
      $region33: #{tpu_custom_call.1} parent=5 // pred_check
        %p228 = pneg %p227
      $region34: #{tpu_custom_call.1} parent=5 // pred_check_branch
        %230 = sbr.rel (%p228) target = $region36
      $region35: #{tpu_custom_call.1} parent=5 // pred_region
        // Predicated region
        $region37: #{tpu_custom_call.1} parent=35 // pred_check
          %p231 = pneg %p50
        $region38: #{tpu_custom_call.1} parent=35 // pred_check_branch
          %233 = sbr.rel (%p231) target = $region40
        $region39: #{tpu_custom_call.1} parent=35 // pred_region
          %s234 = sand.u32 %s40, 1
          %s235 = sand.u32 %s40, 1
          %s236 = smul.addr %s235, 16
          %s237 = scalar_lea.vmem [#allocation2], %s236
          %s238 = smul.u32 2, %s23
          %s239 = smul.u32 2, %s24
          %s240 = smul.addr %s238, 4
          %s241 = sadd.s32 %s239, %s240
          %s242 = smul.addr %s241, 4
          %s243 = scalar_lea.vmem %s0, %s242
          // Predicated region
          $region41: #{tpu_custom_call.1} parent=39 // pred_check
            _
          $region42: #{tpu_custom_call.1} parent=39 // pred_check_branch
            %245 = sbr.rel (0) target = $region44
          $region43: #{tpu_custom_call.1} parent=39 // pred_region
            // Predicated region
            $region45: #{tpu_custom_call.1} parent=43 // pred_check
              _
            $region46: #{tpu_custom_call.1} parent=43 // pred_check_branch
              %247 = sbr.rel target = $region48
            $region47: #{tpu_custom_call.1} parent=43 // pred_region
              // Predicated region
              $region60: #{tpu_custom_call.1} parent=47 // pred_check
                _
              $region61: #{tpu_custom_call.1} parent=47 // pred_check_branch
                %268 = sbr.rel (0) target = $region63
              $region62: #{tpu_custom_call.1} parent=47 // pred_region
                loop: start=0, step=1, limit=1
                $region64: #{tpu_custom_call.1} parent=62 // loop_pre_header
                  _
                $region65: #{tpu_custom_call.1} parent=62 // loop_header
                  %s270 = sphi 0, %s274
                  %p271 = scmp.ge.s32.totalorder %s270, 1
                  %s275 = sphi %s243, %s243
                  %s276 = sphi %s237, %s237
                $region66: #{tpu_custom_call.1} parent=62 // loop_header_branch
                  %273 = sbr.rel (%p271) target = $region70
                $region67: #{tpu_custom_call.1} parent=62 // loop_body
                  _
                $region68: #{tpu_custom_call.1} parent=62 // loop_footer
                  %s274 = sadd.s32 1, %s270
                $region69: #{tpu_custom_call.1} parent=62 // loop_footer_branch
                  %269 = sbr.rel target = $region65
                $region70: #{tpu_custom_call.1} parent=62 // loop_exit
                  _
                loop: start=0, step=1, limit=1
                $region71: #{tpu_custom_call.1} parent=62 // loop_pre_header
                  _
                $region72: #{tpu_custom_call.1} parent=62 // loop_header
                  %s279 = sphi 0, %s283
                  %p280 = scmp.ge.s32.totalorder %s279, 1
                  %s284 = sphi %s243, %s243
                  %s285 = sphi %s237, %s237
                $region73: #{tpu_custom_call.1} parent=62 // loop_header_branch
                  %282 = sbr.rel (%p280) target = $region77
                $region74: #{tpu_custom_call.1} parent=62 // loop_body
                  %v286 = vld [vmem:[%s284] sm:$0xf]
                  %287 = vst [vmem:[%s285] sm:$0xf] %v286
                  %v288 = vld [vmem:[%s284 + $0x4] sm:$0xf]
                  %289 = vst [vmem:[%s285 + $0x4] sm:$0xf] %v288
                  %v290 = vld [vmem:[%s284 + $0x10] sm:$0xf]
                  %291 = vst [vmem:[%s285 + $0x8] sm:$0xf] %v290
                  %v292 = vld [vmem:[%s284 + $0x14] sm:$0xf]
                  %293 = vst [vmem:[%s285 + $0xc] sm:$0xf] %v292
                $region75: #{tpu_custom_call.1} parent=62 // loop_footer
                  %s283 = sadd.s32 1, %s279
                $region76: #{tpu_custom_call.1} parent=62 // loop_footer_branch
                  %278 = sbr.rel target = $region72
                $region77: #{tpu_custom_call.1} parent=62 // loop_exit
                  _
              $region63: #{tpu_custom_call.1} parent=47 // pred_fallthru
                _
            $region48: #{tpu_custom_call.1} parent=43 // pred_fallthru
              _
            // Predicated region
            $region49: #{tpu_custom_call.1} parent=43 // pred_check
              _
            $region50: #{tpu_custom_call.1} parent=43 // pred_check_branch
              %249 = sbr.rel (0) target = $region52
            $region51: #{tpu_custom_call.1} parent=43 // pred_region
              loop: start=0, step=1, limit=1
              $region53: #{tpu_custom_call.1} parent=51 // loop_pre_header
                _
              $region54: #{tpu_custom_call.1} parent=51 // loop_header
                %s252 = sphi 0, %s256
                %p253 = scmp.ge.s32.totalorder %s252, 1
                %s257 = sphi %s243, %s243
                %s258 = sphi %s237, %s237
              $region55: #{tpu_custom_call.1} parent=51 // loop_header_branch
                %255 = sbr.rel (%p253) target = $region59
              $region56: #{tpu_custom_call.1} parent=51 // loop_body
                %v259 = vld [vmem:[%s257] sm:$0xf]
                %260 = vst [vmem:[%s258] sm:$0xf] %v259
                %v261 = vld [vmem:[%s257 + $0x4] sm:$0xf]
                %262 = vst [vmem:[%s258 + $0x4] sm:$0xf] %v261
                %v263 = vld [vmem:[%s257 + $0x10] sm:$0xf]
                %264 = vst [vmem:[%s258 + $0x8] sm:$0xf] %v263
                %v265 = vld [vmem:[%s257 + $0x14] sm:$0xf]
                %266 = vst [vmem:[%s258 + $0xc] sm:$0xf] %v265
              $region57: #{tpu_custom_call.1} parent=51 // loop_footer
                %s256 = sadd.s32 1, %s252
              $region58: #{tpu_custom_call.1} parent=51 // loop_footer_branch
                %251 = sbr.rel target = $region54
              $region59: #{tpu_custom_call.1} parent=51 // loop_exit
                _
            $region52: #{tpu_custom_call.1} parent=43 // pred_fallthru
              _
          $region44: #{tpu_custom_call.1} parent=39 // pred_fallthru
            _
          %294 = vnop
        $region40: #{tpu_custom_call.1} parent=35 // pred_fallthru
          _
      $region36: #{tpu_custom_call.1} parent=5 // pred_fallthru
        _
      %p295 = scmp.le.s32.totalorder 1, %s16
      %p296 = scmp.lt.s32.totalorder %s16, 5
      %p297 = pnand %p295, %p296
      %p298 = pneg %p297
      // Predicated region
      $region78: #{tpu_custom_call.1} parent=5 // pred_check
        _
      $region79: #{tpu_custom_call.1} parent=5 // pred_check_branch
        %300 = sbr.rel (%p297) target = $region81
      $region80: #{tpu_custom_call.1} parent=5 // pred_region
        %s301 = ssub.s32 %s16, 1
        %s302 = sand.u32 %s43, 1
        %s303 = sand.u32 %s43, 1
        %s304 = smul.addr %s303, 16
        %s305 = scalar_lea.vmem [#allocation2], %s304
        // Predicated region
        $region82: #{tpu_custom_call.1} parent=80 // pred_check
          %p306 = pneg %p56
        $region83: #{tpu_custom_call.1} parent=80 // pred_check_branch
          %308 = sbr.rel (%p306) target = $region85
        $region84: #{tpu_custom_call.1} parent=80 // pred_region
          _
        $region85: #{tpu_custom_call.1} parent=80 // pred_fallthru
          _
        // Predicated region
        $region86: #{tpu_custom_call.1} parent=80 // pred_check
          %p309 = pneg %p161
        $region87: #{tpu_custom_call.1} parent=80 // pred_check_branch
          %311 = sbr.rel (%p309) target = $region89
        $region88: #{tpu_custom_call.1} parent=80 // pred_region
          %312 = dma.done [#allocation4], 8192
        $region89: #{tpu_custom_call.1} parent=80 // pred_fallthru
          _
        %s313 = sand.u32 %s43, 1
        %s314 = sand.u32 %s43, 1
        %s315 = smul.addr %s314, 16
        %s316 = scalar_lea.vmem [#allocation2], %s315
        %p317 = pneg %p56
        %p318 = pneg %p53
        %p319 = pneg %p77
        %p320 = pneg %p74
        %p321 = pneg %p98
        %p322 = pneg %p95
        %p323 = pneg %p119
        %p324 = pneg %p116
        %p325 = pneg %p140
        %p326 = pneg %p137
        %p327 = pneg %p161
        %p328 = pneg %p158
        %p329 = pneg %p187
        %p330 = pneg %p184
        %s331 = sand.u32 %s174, 1
        %s332 = scalar_lea.sflag [#allocation5], %s331
        %s333 = sand.u32 %s174, 1
        %s334 = smul.addr %s333, 16
        %s335 = scalar_lea.vmem [#allocation6], %s334
        %s336 = smul.u32 2, %s25
        %s337 = smul.u32 2, %s26
        %s338 = smul.u32 2, %s25
        %p340 = scmp.eq.s32.totalorder %s26, 0
        // Predicated region
        $region90: #{tpu_custom_call.1} parent=80 // pred_check
          %p341 = pneg %p340
        $region91: #{tpu_custom_call.1} parent=80 // pred_check_branch
          %343 = sbr.rel (%p341) target = $region93
        $region92: #{tpu_custom_call.1} parent=80 // pred_region
          %344 = vst [vmem:[%s335] sm:$0xff] -inf
          %345 = vst [vmem:[%s335 + $0x8] sm:$0xff] -inf
        $region93: #{tpu_custom_call.1} parent=80 // pred_fallthru
          _
        %v346 = vld [vmem:[%s305] sm:$0xf]
        %v347 = vld [vmem:[%s305 + $0x4] sm:$0xf]
        %v348 = vld [vmem:[%s305 + $0x8] sm:$0xf]
        %v349 = vld [vmem:[%s305 + $0xc] sm:$0xf]
        %v350 = vld [vmem:[%s1] sm:$0xf]
        %v351 = vld [vmem:[%s2] sm:$0x1]
        %v353 = vlaneseq
        %v354 = vshrl.u32 %v353, 7
        %v355 = vsub.s32 0, %v354
        %v356 = vrot.slane %v351, %v355
        %v362 = vunpack.c.l.b16 %v346
        %v363 = vunpack.c.l.b16 %v347
        %v364 = vunpack.c.l.b16 %v348
        %v365 = vunpack.c.l.b16 %v349
        %v366 = vpack.c.b16 %v363, %v362
        %v367 = vpack.c.b16 %v365, %v364
        %vm368 = vcmask 64512
        %v370 = vsel %vm368, %v366, 0
        %v373 = vsel %vm368, %v367, 0
        %vm375 = vcmask 1043456
        %v377 = vsel %vm375, %v350, 0
        %379 = vmatprep.subr.bf16.mxu0 0
        %380 = vmatpush1.bf16.msra.mxu0 %v377
        %381 = vmatprep.subr.bf16.mxu0 0
        %382 = vmatpush1.bf16.msra.mxu0 0
        %383 = vmatprep.subr.bf16.mxu0 0
        %384 = vmatpush1.bf16.msra.mxu0 0
        %385 = vmatprep.subr.bf16.mxu0 0
        %386 = vmatpush1.bf16.msra.mxu0 0
        %387 = vmatprep.subr.bf16.mxu0 0
        %388 = vmatpush1.bf16.msra.mxu0 0
        %389 = vmatprep.subr.bf16.mxu0 0
        %390 = vmatpush1.bf16.msra.mxu0 0
        %391 = vmatprep.subr.bf16.mxu0 0
        %392 = vmatpush1.bf16.msra.mxu0 0
        %393 = vmatprep.subr.bf16.mxu0 0
        %394 = vmatpush1.bf16.msra.mxu0 0
        %395 = vmatprep.subr.bf16.mxu0 0
        %396 = vmatpush1.bf16.msra.mxu0 0
        %397 = vmatprep.subr.bf16.mxu0 0
        %398 = vmatpush1.bf16.msra.mxu0 0
        %399 = vmatprep.subr.bf16.mxu0 0
        %400 = vmatpush1.bf16.msra.mxu0 0
        %401 = vmatprep.subr.bf16.mxu0 0
        %402 = vmatpush1.bf16.msra.mxu0 0
        %403 = vmatprep.subr.bf16.mxu0 0
        %404 = vmatpush1.bf16.msra.mxu0 0
        %405 = vmatprep.subr.bf16.mxu0 0
        %406 = vmatpush1.bf16.msra.mxu0 0
        %407 = vmatprep.subr.bf16.mxu0 0
        %408 = vmatpush1.bf16.msra.mxu0 0
        %409 = vmatprep.subr.bf16.mxu0 0
        %410 = vmatpush1.bf16.msra.mxu0 0
        %411 = vmatprep.mubr.bf16.mxu0 0
        %412 = vmatmul.mubr.bf16.gmra.mrb[0].mxu0 %v370
        %v413 = vpop.f32.mrb[0].mxu0
        %v414 = vadd.f32 %v356, %v413
        %v415 = vpop.f32.mrb[0].mxu0
        %v416 = vpop.f32.mrb[0].mxu0
        %v417 = vadd.f32 %v356, %v416
        %v418 = vpop.f32.mrb[0].mxu0
        %419 = vmatprep.mubr.bf16.mxu0 0
        %420 = vmatmul.mubr.bf16.gmra.mrb[0].mxu0 %v373
        %v421 = vpop.f32.mrb[0].mxu0
        %v422 = vadd.f32 %v356, %v421
        %v423 = vpop.f32.mrb[0].mxu0
        %v424 = vpop.f32.mrb[0].mxu0
        %v425 = vadd.f32 %v356, %v424
        %v426 = vpop.f32.mrb[0].mxu0
        %427 = vdwg.mxu0
        %v428 = vmax.f32 %v414, 0.0
        %v429 = vmax.f32 %v417, 0.0
        %v430 = vmax.f32 %v422, 0.0
        %v431 = vmax.f32 %v425, 0.0
        %v432 = vpack.c.bf16 %v429, %v428
        %v433 = vpack.c.bf16 %v431, %v430
        %v434 = vld [vmem:[%s3] sm:$0xf]
        %v435 = vld [vmem:[%s3 + $0x4] sm:$0xf]
        %v436 = vld [vmem:[%s3 + $0x8] sm:$0xf]
        %v437 = vld [vmem:[%s3 + $0xc] sm:$0xf]
        %v438 = vld [vmem:[%s3 + $0x10] sm:$0xf]
        %v439 = vld [vmem:[%s3 + $0x14] sm:$0xf]
        %v440 = vld [vmem:[%s3 + $0x18] sm:$0xf]
        %v441 = vld [vmem:[%s3 + $0x1c] sm:$0xf]
        %v442 = vld [vmem:[%s4] sm:$0x1]
        %v444 = vlaneseq
        %v445 = vshrl.u32 %v444, 7
        %v446 = vsub.s32 0, %v445
        %v447 = vrot.slane %v442, %v446
        %v457 = vunpack.c.l.b16 %v434
        %v458 = vunpack.c.l.b16 %v435
        %v459 = vunpack.c.l.b16 %v436
        %v460 = vunpack.c.l.b16 %v437
        %v461 = vunpack.c.l.b16 %v438
        %v462 = vunpack.c.l.b16 %v439
        %v463 = vunpack.c.l.b16 %v440
        %v464 = vunpack.c.l.b16 %v441
        %v465 = vpack.c.b16 %v458, %v457
        %v466 = vpack.c.b16 %v460, %v459
        %v467 = vpack.c.b16 %v462, %v461
        %v468 = vpack.c.b16 %v464, %v463
        %vm473 = vcmask 523264
        %v475 = vsel %vm473, %v432, 0
        %v478 = vsel %vm473, %v433, 0
        %480 = vmatprep.subr.bf16.mxu0 0
        %481 = vmatpush1.bf16.msra.mxu0 %v465
        %482 = vmatprep.subr.bf16.mxu0 0
        %483 = vmatpush1.bf16.msra.mxu0 %v466
        %484 = vmatprep.subr.bf16.mxu0 0
        %485 = vmatpush1.bf16.msra.mxu0 %v467
        %486 = vmatprep.subr.bf16.mxu0 0
        %487 = vmatpush1.bf16.msra.mxu0 %v468
        %488 = vmatprep.subr.bf16.mxu0 0
        %489 = vmatpush1.bf16.msra.mxu0 0
        %490 = vmatprep.subr.bf16.mxu0 0
        %491 = vmatpush1.bf16.msra.mxu0 0
        %492 = vmatprep.subr.bf16.mxu0 0
        %493 = vmatpush1.bf16.msra.mxu0 0
        %494 = vmatprep.subr.bf16.mxu0 0
        %495 = vmatpush1.bf16.msra.mxu0 0
        %496 = vmatprep.subr.bf16.mxu0 0
        %497 = vmatpush1.bf16.msra.mxu0 0
        %498 = vmatprep.subr.bf16.mxu0 0
        %499 = vmatpush1.bf16.msra.mxu0 0
        %500 = vmatprep.subr.bf16.mxu0 0
        %501 = vmatpush1.bf16.msra.mxu0 0
        %502 = vmatprep.subr.bf16.mxu0 0
        %503 = vmatpush1.bf16.msra.mxu0 0
        %504 = vmatprep.subr.bf16.mxu0 0
        %505 = vmatpush1.bf16.msra.mxu0 0
        %506 = vmatprep.subr.bf16.mxu0 0
        %507 = vmatpush1.bf16.msra.mxu0 0
        %508 = vmatprep.subr.bf16.mxu0 0
        %509 = vmatpush1.bf16.msra.mxu0 0
        %510 = vmatprep.subr.bf16.mxu0 0
        %511 = vmatpush1.bf16.msra.mxu0 0
        %512 = vmatprep.mubr.bf16.mxu0 0
        %513 = vmatmul.mubr.bf16.gmra.mrb[0].mxu0 %v475
        %v514 = vpop.f32.mrb[0].mxu0
        %v515 = vadd.f32 %v447, %v514
        %v516 = vpop.f32.mrb[0].mxu0
        %v517 = vpop.f32.mrb[0].mxu0
        %v518 = vadd.f32 %v447, %v517
        %v519 = vpop.f32.mrb[0].mxu0
        %520 = vmatprep.mubr.bf16.mxu0 0
        %521 = vmatmul.mubr.bf16.gmra.mrb[0].mxu0 %v478
        %v522 = vpop.f32.mrb[0].mxu0
        %v523 = vadd.f32 %v447, %v522
        %v524 = vpop.f32.mrb[0].mxu0
        %v525 = vpop.f32.mrb[0].mxu0
        %v526 = vadd.f32 %v447, %v525
        %v527 = vpop.f32.mrb[0].mxu0
        %528 = vdwg.mxu0
        %v529 = vmax.f32 %v515, 0.0
        %v530 = vmax.f32 %v518, 0.0
        %v531 = vmax.f32 %v523, 0.0
        %v532 = vmax.f32 %v526, 0.0
        %v533 = vpack.c.bf16 %v530, %v529
        %v534 = vpack.c.bf16 %v532, %v531
        %v535 = vld [vmem:[#allocation3] sm:$0xff]
        %v536 = vld [vmem:[#allocation3 + $0x8] sm:$0xff]
        %v537 = vld [vmem:[#allocation3 + $0x10] sm:$0xff]
        %v538 = vld [vmem:[#allocation3 + $0x18] sm:$0xff]
        %v539 = vld [vmem:[#allocation3 + $0x20] sm:$0xff]
        %v540 = vld [vmem:[#allocation3 + $0x28] sm:$0xff]
        %v541 = vld [vmem:[#allocation3 + $0x30] sm:$0xff]
        %v542 = vld [vmem:[#allocation3 + $0x38] sm:$0xff]
        %v543 = vld [vmem:[#allocation3 + $0x40] sm:$0xff]
        %v544 = vld [vmem:[#allocation3 + $0x48] sm:$0xff]
        %v545 = vld [vmem:[#allocation3 + $0x50] sm:$0xff]
        %v546 = vld [vmem:[#allocation3 + $0x58] sm:$0xff]
        %v547 = vld [vmem:[#allocation3 + $0x60] sm:$0xff]
        %v548 = vld [vmem:[#allocation3 + $0x68] sm:$0xff]
        %v549 = vld [vmem:[#allocation3 + $0x70] sm:$0xff]
        %v550 = vld [vmem:[#allocation3 + $0x78] sm:$0xff]
        %v551 = vld [vmem:[#allocation3 + $0x80] sm:$0xff]
        %v552 = vld [vmem:[#allocation3 + $0x88] sm:$0xff]
        %v553 = vld [vmem:[#allocation3 + $0x90] sm:$0xff]
        %v554 = vld [vmem:[#allocation3 + $0x98] sm:$0xff]
        %v555 = vld [vmem:[#allocation3 + $0xa0] sm:$0xff]
        %v556 = vld [vmem:[#allocation3 + $0xa8] sm:$0xff]
        %v557 = vld [vmem:[#allocation3 + $0xb0] sm:$0xff]
        %v558 = vld [vmem:[#allocation3 + $0xb8] sm:$0xff]
        %v559 = vld [vmem:[#allocation3 + $0xc0] sm:$0xff]
        %v560 = vld [vmem:[#allocation3 + $0xc8] sm:$0xff]
        %v561 = vld [vmem:[#allocation3 + $0xd0] sm:$0xff]
        %v562 = vld [vmem:[#allocation3 + $0xd8] sm:$0xff]
        %v563 = vld [vmem:[#allocation3 + $0xe0] sm:$0xff]
        %v564 = vld [vmem:[#allocation3 + $0xe8] sm:$0xff]
        %v565 = vld [vmem:[#allocation3 + $0xf0] sm:$0xff]
        %v566 = vld [vmem:[#allocation3 + $0xf8] sm:$0xff]
        %v567 = vld [vmem:[#allocation3 + $0x100] sm:$0xff]
        %v568 = vld [vmem:[#allocation3 + $0x108] sm:$0xff]
        %v569 = vld [vmem:[#allocation3 + $0x110] sm:$0xff]
        %v570 = vld [vmem:[#allocation3 + $0x118] sm:$0xff]
        %v571 = vld [vmem:[#allocation3 + $0x120] sm:$0xff]
        %v572 = vld [vmem:[#allocation3 + $0x128] sm:$0xff]
        %v573 = vld [vmem:[#allocation3 + $0x130] sm:$0xff]
        %v574 = vld [vmem:[#allocation3 + $0x138] sm:$0xff]
        %v575 = vld [vmem:[#allocation3 + $0x140] sm:$0xff]
        %v576 = vld [vmem:[#allocation3 + $0x148] sm:$0xff]
        %v577 = vld [vmem:[#allocation3 + $0x150] sm:$0xff]
        %v578 = vld [vmem:[#allocation3 + $0x158] sm:$0xff]
        %v579 = vld [vmem:[#allocation3 + $0x160] sm:$0xff]
        %v580 = vld [vmem:[#allocation3 + $0x168] sm:$0xff]
        %v581 = vld [vmem:[#allocation3 + $0x170] sm:$0xff]
        %v582 = vld [vmem:[#allocation3 + $0x178] sm:$0xff]
        %v583 = vld [vmem:[#allocation3 + $0x180] sm:$0xff]
        %v584 = vld [vmem:[#allocation3 + $0x188] sm:$0xff]
        %v585 = vld [vmem:[#allocation3 + $0x190] sm:$0xff]
        %v586 = vld [vmem:[#allocation3 + $0x198] sm:$0xff]
        %v587 = vld [vmem:[#allocation3 + $0x1a0] sm:$0xff]
        %v588 = vld [vmem:[#allocation3 + $0x1a8] sm:$0xff]
        %v589 = vld [vmem:[#allocation3 + $0x1b0] sm:$0xff]
        %v590 = vld [vmem:[#allocation3 + $0x1b8] sm:$0xff]
        %v591 = vld [vmem:[#allocation3 + $0x1c0] sm:$0xff]
        %v592 = vld [vmem:[#allocation3 + $0x1c8] sm:$0xff]
        %v593 = vld [vmem:[#allocation3 + $0x1d0] sm:$0xff]
        %v594 = vld [vmem:[#allocation3 + $0x1d8] sm:$0xff]
        %v595 = vld [vmem:[#allocation3 + $0x1e0] sm:$0xff]
        %v596 = vld [vmem:[#allocation3 + $0x1e8] sm:$0xff]
        %v597 = vld [vmem:[#allocation3 + $0x1f0] sm:$0xff]
        %v598 = vld [vmem:[#allocation3 + $0x1f8] sm:$0xff]
        %v663 = vunpack.c.l.b16 %v535
        %v664 = vunpack.c.h.b16 %v535
        %v665 = vunpack.c.l.b16 %v536
        %v666 = vunpack.c.h.b16 %v536
        %v667 = vunpack.c.l.b16 %v537
        %v668 = vunpack.c.h.b16 %v537
        %v669 = vunpack.c.l.b16 %v538
        %v670 = vunpack.c.h.b16 %v538
        %v671 = vunpack.c.l.b16 %v539
        %v672 = vunpack.c.h.b16 %v539
        %v673 = vunpack.c.l.b16 %v540
        %v674 = vunpack.c.h.b16 %v540
        %v675 = vunpack.c.l.b16 %v541
        %v676 = vunpack.c.h.b16 %v541
        %v677 = vunpack.c.l.b16 %v542
        %v678 = vunpack.c.h.b16 %v542
        %v679 = vunpack.c.l.b16 %v543
        %v680 = vunpack.c.h.b16 %v543
        %v681 = vunpack.c.l.b16 %v544
        %v682 = vunpack.c.h.b16 %v544
        %v683 = vunpack.c.l.b16 %v545
        %v684 = vunpack.c.h.b16 %v545
        %v685 = vunpack.c.l.b16 %v546
        %v686 = vunpack.c.h.b16 %v546
        %v687 = vunpack.c.l.b16 %v547
        %v688 = vunpack.c.h.b16 %v547
        %v689 = vunpack.c.l.b16 %v548
        %v690 = vunpack.c.h.b16 %v548
        %v691 = vunpack.c.l.b16 %v549
        %v692 = vunpack.c.h.b16 %v549
        %v693 = vunpack.c.l.b16 %v550
        %v694 = vunpack.c.h.b16 %v550
        %v695 = vunpack.c.l.b16 %v551
        %v696 = vunpack.c.h.b16 %v551
        %v697 = vunpack.c.l.b16 %v552
        %v698 = vunpack.c.h.b16 %v552
        %v699 = vunpack.c.l.b16 %v553
        %v700 = vunpack.c.h.b16 %v553
        %v701 = vunpack.c.l.b16 %v554
        %v702 = vunpack.c.h.b16 %v554
        %v703 = vunpack.c.l.b16 %v555
        %v704 = vunpack.c.h.b16 %v555
        %v705 = vunpack.c.l.b16 %v556
        %v706 = vunpack.c.h.b16 %v556
        %v707 = vunpack.c.l.b16 %v557
        %v708 = vunpack.c.h.b16 %v557
        %v709 = vunpack.c.l.b16 %v558
        %v710 = vunpack.c.h.b16 %v558
        %v711 = vunpack.c.l.b16 %v559
        %v712 = vunpack.c.h.b16 %v559
        %v713 = vunpack.c.l.b16 %v560
        %v714 = vunpack.c.h.b16 %v560
        %v715 = vunpack.c.l.b16 %v561
        %v716 = vunpack.c.h.b16 %v561
        %v717 = vunpack.c.l.b16 %v562
        %v718 = vunpack.c.h.b16 %v562
        %v719 = vunpack.c.l.b16 %v563
        %v720 = vunpack.c.h.b16 %v563
        %v721 = vunpack.c.l.b16 %v564
        %v722 = vunpack.c.h.b16 %v564
        %v723 = vunpack.c.l.b16 %v565
        %v724 = vunpack.c.h.b16 %v565
        %v725 = vunpack.c.l.b16 %v566
        %v726 = vunpack.c.h.b16 %v566
        %v727 = vunpack.c.l.b16 %v567
        %v728 = vunpack.c.h.b16 %v567
        %v729 = vunpack.c.l.b16 %v568
        %v730 = vunpack.c.h.b16 %v568
        %v731 = vunpack.c.l.b16 %v569
        %v732 = vunpack.c.h.b16 %v569
        %v733 = vunpack.c.l.b16 %v570
        %v734 = vunpack.c.h.b16 %v570
        %v735 = vunpack.c.l.b16 %v571
        %v736 = vunpack.c.h.b16 %v571
        %v737 = vunpack.c.l.b16 %v572
        %v738 = vunpack.c.h.b16 %v572
        %v739 = vunpack.c.l.b16 %v573
        %v740 = vunpack.c.h.b16 %v573
        %v741 = vunpack.c.l.b16 %v574
        %v742 = vunpack.c.h.b16 %v574
        %v743 = vunpack.c.l.b16 %v575
        %v744 = vunpack.c.h.b16 %v575
        %v745 = vunpack.c.l.b16 %v576
        %v746 = vunpack.c.h.b16 %v576
        %v747 = vunpack.c.l.b16 %v577
        %v748 = vunpack.c.h.b16 %v577
        %v749 = vunpack.c.l.b16 %v578
        %v750 = vunpack.c.h.b16 %v578
        %v751 = vunpack.c.l.b16 %v579
        %v752 = vunpack.c.h.b16 %v579
        %v753 = vunpack.c.l.b16 %v580
        %v754 = vunpack.c.h.b16 %v580
        %v755 = vunpack.c.l.b16 %v581
        %v756 = vunpack.c.h.b16 %v581
        %v757 = vunpack.c.l.b16 %v582
        %v758 = vunpack.c.h.b16 %v582
        %v759 = vunpack.c.l.b16 %v583
        %v760 = vunpack.c.h.b16 %v583
        %v761 = vunpack.c.l.b16 %v584
        %v762 = vunpack.c.h.b16 %v584
        %v763 = vunpack.c.l.b16 %v585
        %v764 = vunpack.c.h.b16 %v585
        %v765 = vunpack.c.l.b16 %v586
        %v766 = vunpack.c.h.b16 %v586
        %v767 = vunpack.c.l.b16 %v587
        %v768 = vunpack.c.h.b16 %v587
        %v769 = vunpack.c.l.b16 %v588
        %v770 = vunpack.c.h.b16 %v588
        %v771 = vunpack.c.l.b16 %v589
        %v772 = vunpack.c.h.b16 %v589
        %v773 = vunpack.c.l.b16 %v590
        %v774 = vunpack.c.h.b16 %v590
        %v775 = vunpack.c.l.b16 %v591
        %v776 = vunpack.c.h.b16 %v591
        %v777 = vunpack.c.l.b16 %v592
        %v778 = vunpack.c.h.b16 %v592
        %v779 = vunpack.c.l.b16 %v593
        %v780 = vunpack.c.h.b16 %v593
        %v781 = vunpack.c.l.b16 %v594
        %v782 = vunpack.c.h.b16 %v594
        %v783 = vunpack.c.l.b16 %v595
        %v784 = vunpack.c.h.b16 %v595
        %v785 = vunpack.c.l.b16 %v596
        %v786 = vunpack.c.h.b16 %v596
        %v787 = vunpack.c.l.b16 %v597
        %v788 = vunpack.c.h.b16 %v597
        %v789 = vunpack.c.l.b16 %v598
        %v790 = vunpack.c.h.b16 %v598
        %v791 = vpack.c.b16 %v671, %v663
        %v792 = vpack.c.b16 %v672, %v664
        %v793 = vpack.c.b16 %v673, %v665
        %v794 = vpack.c.b16 %v674, %v666
        %v795 = vpack.c.b16 %v675, %v667
        %v796 = vpack.c.b16 %v676, %v668
        %v797 = vpack.c.b16 %v677, %v669
        %v798 = vpack.c.b16 %v678, %v670
        %v799 = vpack.c.b16 %v687, %v679
        %v800 = vpack.c.b16 %v688, %v680
        %v801 = vpack.c.b16 %v689, %v681
        %v802 = vpack.c.b16 %v690, %v682
        %v803 = vpack.c.b16 %v691, %v683
        %v804 = vpack.c.b16 %v692, %v684
        %v805 = vpack.c.b16 %v693, %v685
        %v806 = vpack.c.b16 %v694, %v686
        %v807 = vpack.c.b16 %v703, %v695
        %v808 = vpack.c.b16 %v704, %v696
        %v809 = vpack.c.b16 %v705, %v697
        %v810 = vpack.c.b16 %v706, %v698
        %v811 = vpack.c.b16 %v707, %v699
        %v812 = vpack.c.b16 %v708, %v700
        %v813 = vpack.c.b16 %v709, %v701
        %v814 = vpack.c.b16 %v710, %v702
        %v815 = vpack.c.b16 %v719, %v711
        %v816 = vpack.c.b16 %v720, %v712
        %v817 = vpack.c.b16 %v721, %v713
        %v818 = vpack.c.b16 %v722, %v714
        %v819 = vpack.c.b16 %v723, %v715
        %v820 = vpack.c.b16 %v724, %v716
        %v821 = vpack.c.b16 %v725, %v717
        %v822 = vpack.c.b16 %v726, %v718
        %v823 = vpack.c.b16 %v735, %v727
        %v824 = vpack.c.b16 %v736, %v728
        %v825 = vpack.c.b16 %v737, %v729
        %v826 = vpack.c.b16 %v738, %v730
        %v827 = vpack.c.b16 %v739, %v731
        %v828 = vpack.c.b16 %v740, %v732
        %v829 = vpack.c.b16 %v741, %v733
        %v830 = vpack.c.b16 %v742, %v734
        %v831 = vpack.c.b16 %v751, %v743
        %v832 = vpack.c.b16 %v752, %v744
        %v833 = vpack.c.b16 %v753, %v745
        %v834 = vpack.c.b16 %v754, %v746
        %v835 = vpack.c.b16 %v755, %v747
        %v836 = vpack.c.b16 %v756, %v748
        %v837 = vpack.c.b16 %v757, %v749
        %v838 = vpack.c.b16 %v758, %v750
        %v839 = vpack.c.b16 %v767, %v759
        %v840 = vpack.c.b16 %v768, %v760
        %v841 = vpack.c.b16 %v769, %v761
        %v842 = vpack.c.b16 %v770, %v762
        %v843 = vpack.c.b16 %v771, %v763
        %v844 = vpack.c.b16 %v772, %v764
        %v845 = vpack.c.b16 %v773, %v765
        %v846 = vpack.c.b16 %v774, %v766
        %v847 = vpack.c.b16 %v783, %v775
        %v848 = vpack.c.b16 %v784, %v776
        %v849 = vpack.c.b16 %v785, %v777
        %v850 = vpack.c.b16 %v786, %v778
        %v851 = vpack.c.b16 %v787, %v779
        %v852 = vpack.c.b16 %v788, %v780
        %v853 = vpack.c.b16 %v789, %v781
        %v854 = vpack.c.b16 %v790, %v782
        %919 = vmatprep.subr.bf16.mxu0 %v792
        %920 = vmatpush1.bf16.msra.mxu0 %v791
        %921 = vmatprep.subr.bf16.mxu0 %v800
        %922 = vmatpush1.bf16.msra.mxu0 %v799
        %923 = vmatprep.subr.bf16.mxu0 %v808
        %924 = vmatpush1.bf16.msra.mxu0 %v807
        %925 = vmatprep.subr.bf16.mxu0 %v816
        %926 = vmatpush1.bf16.msra.mxu0 %v815
        %927 = vmatprep.subr.bf16.mxu0 %v824
        %928 = vmatpush1.bf16.msra.mxu0 %v823
        %929 = vmatprep.subr.bf16.mxu0 %v832
        %930 = vmatpush1.bf16.msra.mxu0 %v831
        %931 = vmatprep.subr.bf16.mxu0 %v840
        %932 = vmatpush1.bf16.msra.mxu0 %v839
        %933 = vmatprep.subr.bf16.mxu0 %v848
        %934 = vmatpush1.bf16.msra.mxu0 %v847
        %935 = vmatprep.subr.bf16.mxu0 0
        %936 = vmatpush1.bf16.msra.mxu0 0
        %937 = vmatprep.subr.bf16.mxu0 0
        %938 = vmatpush1.bf16.msra.mxu0 0
        %939 = vmatprep.subr.bf16.mxu0 0
        %940 = vmatpush1.bf16.msra.mxu0 0
        %941 = vmatprep.subr.bf16.mxu0 0
        %942 = vmatpush1.bf16.msra.mxu0 0
        %943 = vmatprep.subr.bf16.mxu0 0
        %944 = vmatpush1.bf16.msra.mxu0 0
        %945 = vmatprep.subr.bf16.mxu0 0
        %946 = vmatpush1.bf16.msra.mxu0 0
        %947 = vmatprep.subr.bf16.mxu0 0
        %948 = vmatpush1.bf16.msra.mxu0 0
        %949 = vmatprep.subr.bf16.mxu0 0
        %950 = vmatpush1.bf16.msra.mxu0 0
        %951 = vmatprep.mubr.bf16.mxu0 0
        %952 = vmatmul.mubr.bf16.gmra.mrb[0].mxu0 %v533
        %v953 = vpop.f32.mrb[0].mxu0
        %v954 = vadd.f32 0.0, %v953
        %v955 = vpop.f32.mrb[0].mxu0
        %v956 = vadd.f32 0.0, %v955
        %v957 = vpop.f32.mrb[0].mxu0
        %v958 = vadd.f32 0.0, %v957
        %v959 = vpop.f32.mrb[0].mxu0
        %v960 = vadd.f32 0.0, %v959
        %961 = vmatprep.mubr.bf16.mxu0 0
        %962 = vmatmul.mubr.bf16.gmra.mrb[0].mxu0 %v534
        %v963 = vpop.f32.mrb[0].mxu0
        %v964 = vadd.f32 0.0, %v963
        %v965 = vpop.f32.mrb[0].mxu0
        %v966 = vadd.f32 0.0, %v965
        %v967 = vpop.f32.mrb[0].mxu0
        %v968 = vadd.f32 0.0, %v967
        %v969 = vpop.f32.mrb[0].mxu0
        %v970 = vadd.f32 0.0, %v969
        %971 = vdwg.mxu0
        %972 = vmatprep.subr.bf16.mxu0 %v794
        %973 = vmatpush1.bf16.msra.mxu0 %v793
        %974 = vmatprep.subr.bf16.mxu0 %v802
        %975 = vmatpush1.bf16.msra.mxu0 %v801
        %976 = vmatprep.subr.bf16.mxu0 %v810
        %977 = vmatpush1.bf16.msra.mxu0 %v809
        %978 = vmatprep.subr.bf16.mxu0 %v818
        %979 = vmatpush1.bf16.msra.mxu0 %v817
        %980 = vmatprep.subr.bf16.mxu0 %v826
        %981 = vmatpush1.bf16.msra.mxu0 %v825
        %982 = vmatprep.subr.bf16.mxu0 %v834
        %983 = vmatpush1.bf16.msra.mxu0 %v833
        %984 = vmatprep.subr.bf16.mxu0 %v842
        %985 = vmatpush1.bf16.msra.mxu0 %v841
        %986 = vmatprep.subr.bf16.mxu0 %v850
        %987 = vmatpush1.bf16.msra.mxu0 %v849
        %988 = vmatprep.subr.bf16.mxu0 0
        %989 = vmatpush1.bf16.msra.mxu0 0
        %990 = vmatprep.subr.bf16.mxu0 0
        %991 = vmatpush1.bf16.msra.mxu0 0
        %992 = vmatprep.subr.bf16.mxu0 0
        %993 = vmatpush1.bf16.msra.mxu0 0
        %994 = vmatprep.subr.bf16.mxu0 0
        %995 = vmatpush1.bf16.msra.mxu0 0
        %996 = vmatprep.subr.bf16.mxu0 0
        %997 = vmatpush1.bf16.msra.mxu0 0
        %998 = vmatprep.subr.bf16.mxu0 0
        %999 = vmatpush1.bf16.msra.mxu0 0
        %1000 = vmatprep.subr.bf16.mxu0 0
        %1001 = vmatpush1.bf16.msra.mxu0 0
        %1002 = vmatprep.subr.bf16.mxu0 0
        %1003 = vmatpush1.bf16.msra.mxu0 0
        %1004 = vmatprep.mubr.bf16.mxu0 0
        %1005 = vmatmul.mubr.bf16.gmra.mrb[0].mxu0 %v533
        %v1006 = vpop.f32.mrb[0].mxu0
        %v1007 = vadd.f32 0.0, %v1006
        %v1008 = vpop.f32.mrb[0].mxu0
        %v1009 = vadd.f32 0.0, %v1008
        %v1010 = vpop.f32.mrb[0].mxu0
        %v1011 = vadd.f32 0.0, %v1010
        %v1012 = vpop.f32.mrb[0].mxu0
        %v1013 = vadd.f32 0.0, %v1012
        %1014 = vmatprep.mubr.bf16.mxu0 0
        %1015 = vmatmul.mubr.bf16.gmra.mrb[0].mxu0 %v534
        %v1016 = vpop.f32.mrb[0].mxu0
        %v1017 = vadd.f32 0.0, %v1016
        %v1018 = vpop.f32.mrb[0].mxu0
        %v1019 = vadd.f32 0.0, %v1018
        %v1020 = vpop.f32.mrb[0].mxu0
        %v1021 = vadd.f32 0.0, %v1020
        %v1022 = vpop.f32.mrb[0].mxu0
        %v1023 = vadd.f32 0.0, %v1022
        %1024 = vdwg.mxu0
        %1025 = vmatprep.subr.bf16.mxu0 %v796
        %1026 = vmatpush1.bf16.msra.mxu0 %v795
        %1027 = vmatprep.subr.bf16.mxu0 %v804
        %1028 = vmatpush1.bf16.msra.mxu0 %v803
        %1029 = vmatprep.subr.bf16.mxu0 %v812
        %1030 = vmatpush1.bf16.msra.mxu0 %v811
        %1031 = vmatprep.subr.bf16.mxu0 %v820
        %1032 = vmatpush1.bf16.msra.mxu0 %v819
        %1033 = vmatprep.subr.bf16.mxu0 %v828
        %1034 = vmatpush1.bf16.msra.mxu0 %v827
        %1035 = vmatprep.subr.bf16.mxu0 %v836
        %1036 = vmatpush1.bf16.msra.mxu0 %v835
        %1037 = vmatprep.subr.bf16.mxu0 %v844
        %1038 = vmatpush1.bf16.msra.mxu0 %v843
        %1039 = vmatprep.subr.bf16.mxu0 %v852
        %1040 = vmatpush1.bf16.msra.mxu0 %v851
        %1041 = vmatprep.subr.bf16.mxu0 0
        %1042 = vmatpush1.bf16.msra.mxu0 0
        %1043 = vmatprep.subr.bf16.mxu0 0
        %1044 = vmatpush1.bf16.msra.mxu0 0
        %1045 = vmatprep.subr.bf16.mxu0 0
        %1046 = vmatpush1.bf16.msra.mxu0 0
        %1047 = vmatprep.subr.bf16.mxu0 0
        %1048 = vmatpush1.bf16.msra.mxu0 0
        %1049 = vmatprep.subr.bf16.mxu0 0
        %1050 = vmatpush1.bf16.msra.mxu0 0
        %1051 = vmatprep.subr.bf16.mxu0 0
        %1052 = vmatpush1.bf16.msra.mxu0 0
        %1053 = vmatprep.subr.bf16.mxu0 0
        %1054 = vmatpush1.bf16.msra.mxu0 0
        %1055 = vmatprep.subr.bf16.mxu0 0
        %1056 = vmatpush1.bf16.msra.mxu0 0
        %1057 = vmatprep.mubr.bf16.mxu0 0
        %1058 = vmatmul.mubr.bf16.gmra.mrb[0].mxu0 %v533
        %v1059 = vpop.f32.mrb[0].mxu0
        %v1060 = vadd.f32 0.0, %v1059
        %v1061 = vpop.f32.mrb[0].mxu0
        %v1062 = vadd.f32 0.0, %v1061
        %v1063 = vpop.f32.mrb[0].mxu0
        %v1064 = vadd.f32 0.0, %v1063
        %v1065 = vpop.f32.mrb[0].mxu0
        %v1066 = vadd.f32 0.0, %v1065
        %1067 = vmatprep.mubr.bf16.mxu0 0
        %1068 = vmatmul.mubr.bf16.gmra.mrb[0].mxu0 %v534
        %v1069 = vpop.f32.mrb[0].mxu0
        %v1070 = vadd.f32 0.0, %v1069
        %v1071 = vpop.f32.mrb[0].mxu0
        %v1072 = vadd.f32 0.0, %v1071
        %v1073 = vpop.f32.mrb[0].mxu0
        %v1074 = vadd.f32 0.0, %v1073
        %v1075 = vpop.f32.mrb[0].mxu0
        %v1076 = vadd.f32 0.0, %v1075
        %1077 = vdwg.mxu0
        %1078 = vmatprep.subr.bf16.mxu0 %v798
        %1079 = vmatpush1.bf16.msra.mxu0 %v797
        %1080 = vmatprep.subr.bf16.mxu0 %v806
        %1081 = vmatpush1.bf16.msra.mxu0 %v805
        %1082 = vmatprep.subr.bf16.mxu0 %v814
        %1083 = vmatpush1.bf16.msra.mxu0 %v813
        %1084 = vmatprep.subr.bf16.mxu0 %v822
        %1085 = vmatpush1.bf16.msra.mxu0 %v821
        %1086 = vmatprep.subr.bf16.mxu0 %v830
        %1087 = vmatpush1.bf16.msra.mxu0 %v829
        %1088 = vmatprep.subr.bf16.mxu0 %v838
        %1089 = vmatpush1.bf16.msra.mxu0 %v837
        %1090 = vmatprep.subr.bf16.mxu0 %v846
        %1091 = vmatpush1.bf16.msra.mxu0 %v845
        %1092 = vmatprep.subr.bf16.mxu0 %v854
        %1093 = vmatpush1.bf16.msra.mxu0 %v853
        %1094 = vmatprep.subr.bf16.mxu0 0
        %1095 = vmatpush1.bf16.msra.mxu0 0
        %1096 = vmatprep.subr.bf16.mxu0 0
        %1097 = vmatpush1.bf16.msra.mxu0 0
        %1098 = vmatprep.subr.bf16.mxu0 0
        %1099 = vmatpush1.bf16.msra.mxu0 0
        %1100 = vmatprep.subr.bf16.mxu0 0
        %1101 = vmatpush1.bf16.msra.mxu0 0
        %1102 = vmatprep.subr.bf16.mxu0 0
        %1103 = vmatpush1.bf16.msra.mxu0 0
        %1104 = vmatprep.subr.bf16.mxu0 0
        %1105 = vmatpush1.bf16.msra.mxu0 0
        %1106 = vmatprep.subr.bf16.mxu0 0
        %1107 = vmatpush1.bf16.msra.mxu0 0
        %1108 = vmatprep.subr.bf16.mxu0 0
        %1109 = vmatpush1.bf16.msra.mxu0 0
        %1110 = vmatprep.mubr.bf16.mxu0 0
        %1111 = vmatmul.mubr.bf16.gmra.mrb[0].mxu0 %v533
        %v1112 = vpop.f32.mrb[0].mxu0
        %v1113 = vadd.f32 0.0, %v1112
        %v1114 = vpop.f32.mrb[0].mxu0
        %v1115 = vadd.f32 0.0, %v1114
        %v1116 = vpop.f32.mrb[0].mxu0
        %v1117 = vadd.f32 0.0, %v1116
        %v1118 = vpop.f32.mrb[0].mxu0
        %v1119 = vadd.f32 0.0, %v1118
        %1120 = vmatprep.mubr.bf16.mxu0 0
        %1121 = vmatmul.mubr.bf16.gmra.mrb[0].mxu0 %v534
        %v1122 = vpop.f32.mrb[0].mxu0
        %v1123 = vadd.f32 0.0, %v1122
        %v1124 = vpop.f32.mrb[0].mxu0
        %v1125 = vadd.f32 0.0, %v1124
        %v1126 = vpop.f32.mrb[0].mxu0
        %v1127 = vadd.f32 0.0, %v1126
        %v1128 = vpop.f32.mrb[0].mxu0
        %v1129 = vadd.f32 0.0, %v1128
        %1130 = vdwg.mxu0
        %v1131 = vmax.f32 %v954, %v958
        %v1132 = vrot.slane %v1131, 4
        %v1133 = vmax.f32 %v1131, %v1132
        %v1134 = vrot.slane %v1133, 2
        %v1135 = vmax.f32 %v1133, %v1134
        %v1136 = vrot.slane %v1135, 1
        %v1137 = vmax.f32 %v1135, %v1136
        %v1138 = vmax.f32 %v956, %v960
        %v1139 = vrot.slane %v1138, 4
        %v1140 = vmax.f32 %v1138, %v1139
        %v1141 = vrot.slane %v1140, 2
        %v1142 = vmax.f32 %v1140, %v1141
        %v1143 = vrot.slane %v1142, 1
        %v1144 = vmax.f32 %v1142, %v1143
        %v1145 = vmax.f32 %v1007, %v1011
        %v1146 = vrot.slane %v1145, 4
        %v1147 = vmax.f32 %v1145, %v1146
        %v1148 = vrot.slane %v1147, 2
        %v1149 = vmax.f32 %v1147, %v1148
        %v1150 = vrot.slane %v1149, 1
        %v1151 = vmax.f32 %v1149, %v1150
        %v1152 = vmax.f32 %v1009, %v1013
        %v1153 = vrot.slane %v1152, 4
        %v1154 = vmax.f32 %v1152, %v1153
        %v1155 = vrot.slane %v1154, 2
        %v1156 = vmax.f32 %v1154, %v1155
        %v1157 = vrot.slane %v1156, 1
        %v1158 = vmax.f32 %v1156, %v1157
        %v1159 = vmax.f32 %v1060, %v1064
        %v1160 = vrot.slane %v1159, 4
        %v1161 = vmax.f32 %v1159, %v1160
        %v1162 = vrot.slane %v1161, 2
        %v1163 = vmax.f32 %v1161, %v1162
        %v1164 = vrot.slane %v1163, 1
        %v1165 = vmax.f32 %v1163, %v1164
        %v1166 = vmax.f32 %v1062, %v1066
        %v1167 = vrot.slane %v1166, 4
        %v1168 = vmax.f32 %v1166, %v1167
        %v1169 = vrot.slane %v1168, 2
        %v1170 = vmax.f32 %v1168, %v1169
        %v1171 = vrot.slane %v1170, 1
        %v1172 = vmax.f32 %v1170, %v1171
        %v1173 = vmax.f32 %v1113, %v1117
        %v1174 = vrot.slane %v1173, 4
        %v1175 = vmax.f32 %v1173, %v1174
        %v1176 = vrot.slane %v1175, 2
        %v1177 = vmax.f32 %v1175, %v1176
        %v1178 = vrot.slane %v1177, 1
        %v1179 = vmax.f32 %v1177, %v1178
        %v1180 = vmax.f32 %v1115, %v1119
        %v1181 = vrot.slane %v1180, 4
        %v1182 = vmax.f32 %v1180, %v1181
        %v1183 = vrot.slane %v1182, 2
        %v1184 = vmax.f32 %v1182, %v1183
        %v1185 = vrot.slane %v1184, 1
        %v1186 = vmax.f32 %v1184, %v1185
        %v1187 = vmax.f32 %v964, %v968
        %v1188 = vrot.slane %v1187, 4
        %v1189 = vmax.f32 %v1187, %v1188
        %v1190 = vrot.slane %v1189, 2
        %v1191 = vmax.f32 %v1189, %v1190
        %v1192 = vrot.slane %v1191, 1
        %v1193 = vmax.f32 %v1191, %v1192
        %v1194 = vmax.f32 %v966, %v970
        %v1195 = vrot.slane %v1194, 4
        %v1196 = vmax.f32 %v1194, %v1195
        %v1197 = vrot.slane %v1196, 2
        %v1198 = vmax.f32 %v1196, %v1197
        %v1199 = vrot.slane %v1198, 1
        %v1200 = vmax.f32 %v1198, %v1199
        %v1201 = vmax.f32 %v1017, %v1021
        %v1202 = vrot.slane %v1201, 4
        %v1203 = vmax.f32 %v1201, %v1202
        %v1204 = vrot.slane %v1203, 2
        %v1205 = vmax.f32 %v1203, %v1204
        %v1206 = vrot.slane %v1205, 1
        %v1207 = vmax.f32 %v1205, %v1206
        %v1208 = vmax.f32 %v1019, %v1023
        %v1209 = vrot.slane %v1208, 4
        %v1210 = vmax.f32 %v1208, %v1209
        %v1211 = vrot.slane %v1210, 2
        %v1212 = vmax.f32 %v1210, %v1211
        %v1213 = vrot.slane %v1212, 1
        %v1214 = vmax.f32 %v1212, %v1213
        %v1215 = vmax.f32 %v1070, %v1074
        %v1216 = vrot.slane %v1215, 4
        %v1217 = vmax.f32 %v1215, %v1216
        %v1218 = vrot.slane %v1217, 2
        %v1219 = vmax.f32 %v1217, %v1218
        %v1220 = vrot.slane %v1219, 1
        %v1221 = vmax.f32 %v1219, %v1220
        %v1222 = vmax.f32 %v1072, %v1076
        %v1223 = vrot.slane %v1222, 4
        %v1224 = vmax.f32 %v1222, %v1223
        %v1225 = vrot.slane %v1224, 2
        %v1226 = vmax.f32 %v1224, %v1225
        %v1227 = vrot.slane %v1226, 1
        %v1228 = vmax.f32 %v1226, %v1227
        %v1229 = vmax.f32 %v1123, %v1127
        %v1230 = vrot.slane %v1229, 4
        %v1231 = vmax.f32 %v1229, %v1230
        %v1232 = vrot.slane %v1231, 2
        %v1233 = vmax.f32 %v1231, %v1232
        %v1234 = vrot.slane %v1233, 1
        %v1235 = vmax.f32 %v1233, %v1234
        %v1236 = vmax.f32 %v1125, %v1129
        %v1237 = vrot.slane %v1236, 4
        %v1238 = vmax.f32 %v1236, %v1237
        %v1239 = vrot.slane %v1238, 2
        %v1240 = vmax.f32 %v1238, %v1239
        %v1241 = vrot.slane %v1240, 1
        %v1242 = vmax.f32 %v1240, %v1241
        %v1243 = vld [vmem:[%s335] sm:$0xff]
        %v1244 = vld [vmem:[%s335 + $0x8] sm:$0xff]
        %v1261 = vcombine.low %v1137, %v1144
        %v1262 = vcombine.low %v1151, %v1158
        %v1263 = vcombine.low %v1165, %v1172
        %v1264 = vcombine.low %v1179, %v1186
        %v1266 = vunpack.c.l.s4 1966171168
        %v1267 = vunpack.c.0.s8 %v1266
        %v1268 = vlaneseq
        %v1269 = vshrl.u32 %v1268, 7
        %v1270 = vsub.s32 %v1267, %v1269
        %v1271 = vrot.slane %v1261, %v1270
        %v1273 = vunpack.c.l.s4 1966171168
        %v1274 = vunpack.c.0.s8 %v1273
        %v1275 = vlaneseq
        %v1276 = vshrl.u32 %v1275, 7
        %v1277 = vsub.s32 %v1274, %v1276
        %v1278 = vrot.slane %v1262, %v1277
        %v1280 = vunpack.c.l.s4 1966171168
        %v1281 = vunpack.c.0.s8 %v1280
        %v1282 = vlaneseq
        %v1283 = vshrl.u32 %v1282, 7
        %v1284 = vsub.s32 %v1281, %v1283
        %v1285 = vrot.slane %v1263, %v1284
        %v1287 = vunpack.c.l.s4 1966171168
        %v1288 = vunpack.c.0.s8 %v1287
        %v1289 = vlaneseq
        %v1290 = vshrl.u32 %v1289, 7
        %v1291 = vsub.s32 %v1288, %v1290
        %v1292 = vrot.slane %v1264, %v1291
        %v1293 = vcombine.low %v1271, %v1278
        %v1294 = vcombine.low %v1285, %v1292
        %v1296 = vunpack.c.l.s4 1966171168
        %v1297 = vunpack.c.0.s8 %v1296
        %v1298 = vlaneseq
        %v1299 = vshrl.u32 %v1298, 7
        %v1300 = vsub.s32 %v1297, %v1299
        %v1301 = vrot.slane %v1293, %v1300
        %v1303 = vunpack.c.l.s4 1966171168
        %v1304 = vunpack.c.0.s8 %v1303
        %v1305 = vlaneseq
        %v1306 = vshrl.u32 %v1305, 7
        %v1307 = vsub.s32 %v1304, %v1306
        %v1308 = vrot.slane %v1294, %v1307
        %v1309 = vcombine.low %v1301, %v1308
        %v1310 = vcombine.low %v1193, %v1200
        %v1311 = vcombine.low %v1207, %v1214
        %v1312 = vcombine.low %v1221, %v1228
        %v1313 = vcombine.low %v1235, %v1242
        %v1315 = vunpack.c.l.s4 1966171168
        %v1316 = vunpack.c.0.s8 %v1315
        %v1317 = vlaneseq
        %v1318 = vshrl.u32 %v1317, 7
        %v1319 = vsub.s32 %v1316, %v1318
        %v1320 = vrot.slane %v1310, %v1319
        %v1322 = vunpack.c.l.s4 1966171168
        %v1323 = vunpack.c.0.s8 %v1322
        %v1324 = vlaneseq
        %v1325 = vshrl.u32 %v1324, 7
        %v1326 = vsub.s32 %v1323, %v1325
        %v1327 = vrot.slane %v1311, %v1326
        %v1329 = vunpack.c.l.s4 1966171168
        %v1330 = vunpack.c.0.s8 %v1329
        %v1331 = vlaneseq
        %v1332 = vshrl.u32 %v1331, 7
        %v1333 = vsub.s32 %v1330, %v1332
        %v1334 = vrot.slane %v1312, %v1333
        %v1336 = vunpack.c.l.s4 1966171168
        %v1337 = vunpack.c.0.s8 %v1336
        %v1338 = vlaneseq
        %v1339 = vshrl.u32 %v1338, 7
        %v1340 = vsub.s32 %v1337, %v1339
        %v1341 = vrot.slane %v1313, %v1340
        %v1342 = vcombine.low %v1320, %v1327
        %v1343 = vcombine.low %v1334, %v1341
        %v1345 = vunpack.c.l.s4 1966171168
        %v1346 = vunpack.c.0.s8 %v1345
        %v1347 = vlaneseq
        %v1348 = vshrl.u32 %v1347, 7
        %v1349 = vsub.s32 %v1346, %v1348
        %v1350 = vrot.slane %v1342, %v1349
        %v1352 = vunpack.c.l.s4 1966171168
        %v1353 = vunpack.c.0.s8 %v1352
        %v1354 = vlaneseq
        %v1355 = vshrl.u32 %v1354, 7
        %v1356 = vsub.s32 %v1353, %v1355
        %v1357 = vrot.slane %v1343, %v1356
        %v1358 = vcombine.low %v1350, %v1357
        %v1361 = vmax.f32 %v1243, %v1309
        %v1362 = vmax.f32 %v1244, %v1358
        %1363 = vst [vmem:[%s335] sm:$0xff] %v1361
        %1364 = vst [vmem:[%s335 + $0x8] sm:$0xff] %v1362
        %s1365 = sand.u32 %s174, 1
        %s1366 = scalar_lea.sflag [#allocation5], %s1365
        %s1367 = sand.u32 %s174, 1
        %s1368 = smul.addr %s1367, 16
        %s1369 = scalar_lea.vmem [#allocation6], %s1368
        // Predicated region
        $region94: #{tpu_custom_call.1} parent=80 // pred_check
          %p1370 = pneg %p184
        $region95: #{tpu_custom_call.1} parent=80 // pred_check_branch
          %1372 = sbr.rel (%p1370) target = $region97
        $region96: #{tpu_custom_call.1} parent=80 // pred_region
          %s1373 = smul.u32 2, %s25
          %s1375 = ssub.s32 256, 256
          %1376 = vsyncadd %s1366, %s1375
          %s1377 = smul.addr %s1373, 8
          %s1378 = smul.addr %s1377, 16
          %s1379 = scalar_lea.hbm %s6, %s1378
          %s1380 = sshll.u32 %s1369, 4
          %s1381 = int_to_ptr.vmem [resolvable:$true] %s1380
          %1386 = dma.vmem_to_hbm [thread:$0]  %s1381, 256, %s1379, %s1366, 128, 128, 8
        $region97: #{tpu_custom_call.1} parent=80 // pred_fallthru
          _
      $region81: #{tpu_custom_call.1} parent=5 // pred_fallthru
        _
      %p1387 = scmp.le.s32.totalorder 2, %s16
      // Predicated region
      $region98: #{tpu_custom_call.1} parent=5 // pred_check
        %p1388 = pneg %p1387
      $region99: #{tpu_custom_call.1} parent=5 // pred_check_branch
        %1390 = sbr.rel (%p1388) target = $region101
      $region100: #{tpu_custom_call.1} parent=5 // pred_region
        %s1391 = ssub.s32 %s16, 2
        // Predicated region
        $region102: #{tpu_custom_call.1} parent=100 // pred_check
          %p1392 = pneg %p190
        $region103: #{tpu_custom_call.1} parent=100 // pred_check_branch
          %1394 = sbr.rel (%p1392) target = $region105
        $region104: #{tpu_custom_call.1} parent=100 // pred_region
          %s1395 = sand.u32 %s175, 1
          %s1396 = scalar_lea.sflag [#allocation5], %s1395
          %s1397 = sand.u32 %s175, 1
          %s1398 = smul.addr %s1397, 16
          %s1399 = scalar_lea.vmem [#allocation6], %s1398
          %1400 = dma.done %s1396, 256
        $region105: #{tpu_custom_call.1} parent=100 // pred_fallthru
          _
      $region101: #{tpu_custom_call.1} parent=5 // pred_fallthru
        _
    $region6: #{tpu_custom_call.1} parent=1 // loop_footer
      %s20 = sadd.s32 1, %s16
    $region7: #{tpu_custom_call.1} parent=1 // loop_footer_branch
      %15 = sbr.rel target = $region3
    $region8: #{tpu_custom_call.1} parent=1 // loop_exit
      _
    %1401 = vsyncpa [#allocation4], 1
    %s1402 = scalar_lea.sflag [#allocation4], 1
    %1403 = vsyncpa %s1402, 1
    %1404 = vsyncpa [#allocation5], 1
    %s1405 = scalar_lea.sflag [#allocation5], 1
    %1406 = vsyncpa %s1405, 1

</llo_original>
